<compile_context>
chip_gen: v7x
topology: tpu7x:2x2x1
jax: 0.10.0
libtpu: 0.0.40
codegen_flags: <defaults>
</compile_context>

<pallas_src>
import functools

import jax
import jax.numpy as jnp
from jax.experimental import pallas as pl
from jax.experimental.pallas import tpu as pltpu


def _vmem_capacity_bytes():
    """Physical VMEM per TensorCore; conservative 64 MiB fallback (v7x)."""
    try:
        info = pltpu.get_tpu_info()
        for name in ("vmem_capacity_bytes", "vmem_size_bytes"):
            cap = getattr(info, name, None)
            if cap:
                return int(cap)
    except Exception:
        pass
    return 64 * 1024 * 1024


def _largest_divisor_leq(n, cap):
    for d in range(min(n, cap), 0, -1):
        if n % d == 0:
            return d
    return 1


def _channel_attention_kernel(x_ref, w1_ref, w2_ref, o_ref, mmax_ref, *,
                              hw_total, tile_hw):
    # x_ref : (Bt, C, tile_hw)  native NCHW block, spatial on the lane axis
    # w1_ref: (C, Cr)   w2_ref: (Cr, C)   (resident in VMEM)
    # o_ref : (Bt, C)   mmax_ref: (Bt, C) f32 running-max scratch
    k = pl.program_id(1)
    last = pl.num_programs(1) - 1

    @pl.when(k == 0)
    def _init():
        mmax_ref[...] = jnp.full(mmax_ref.shape, -jnp.inf, dtype=mmax_ref.dtype)

    def _accumulate(x):
        tile_max = jnp.max(x, axis=-1).astype(jnp.float32)          # (Bt, C)
        mmax_ref[...] = jnp.maximum(mmax_ref[...], tile_max)

    if hw_total % tile_hw == 0:
        # Evenly tiled: no masking anywhere (static branch).
        _accumulate(x_ref[...])
    else:
        # Only the last (ragged) tile pays for iota + compare + select.
        @pl.when(k != last)
        def _full_tile():
            _accumulate(x_ref[...])

        @pl.when(k == last)
        def _ragged_tile():
            x = x_ref[...]
            col = jax.lax.broadcasted_iota(jnp.int32, x.shape, dimension=2)
            x = jnp.where(col + k * tile_hw < hw_total, x, -jnp.inf)
            _accumulate(x)

    @pl.when(k == last)
    def _epilogue():
        m = mmax_ref[...]                                                     # (Bt, C)
        h = jnp.maximum(
            jnp.dot(m, w1_ref[...], preferred_element_type=jnp.float32), 0.0)  # fc1+ReLU
        y = jnp.dot(h, w2_ref[...], preferred_element_type=jnp.float32)        # fc2
        o_ref[...] = jax.nn.sigmoid(y).astype(o_ref.dtype)                     # Sigmoid


def channel_attention(x, fc1_w, fc2_w, *, tile_hw=None, batch_tile=None,
                      target_tile_bytes=None):
    """x: (B, C, H, W) NCHW; fc1_w: (C//r, C, 1, 1); fc2_w: (C, C//r, 1, 1)."""
    B, C, H, W = x.shape
    HW = H * W
    Cr = fc1_w.shape[0]
    itemsize = jnp.dtype(x.dtype).itemsize

    # Native-layout view: pure reshape, NO extra HBM transpose pass.
    x_flat = x.reshape(B, C, HW)                 # (B, C, HW)
    w1 = fc1_w.reshape(Cr, C).T                  # (C, Cr)  tiny
    w2 = fc2_w.reshape(C, Cr).T                  # (Cr, C)  tiny

    vmem_cap = _vmem_capacity_bytes()
    if target_tile_bytes is None:
        # Bigger tiles on 128 MiB parts (v5e/v6e), smaller on v7x (64 MiB).
        target_tile_bytes = (16 * 1024 * 1024 if vmem_cap >= 96 * 1024 * 1024
                             else 8 * 1024 * 1024)

    # Batch blocking: largest divisor of B up to 8 (or user cap).
    if batch_tile is None:
        Bt = _largest_divisor_leq(B, 8)
    else:
        Bt = _largest_divisor_leq(B, max(1, int(batch_tile)))

    # HW tile sizing: lane dim must be a multiple of 128 unless it spans all of
    # HW.  Keep 2x tile (double-buffered) well under physical VMEM.
    row_bytes = max(1, Bt * C * itemsize)
    max_tile_bytes = max(128 * row_bytes, int(0.3 * vmem_cap))
    if tile_hw is None:
        tile_hw = target_tile_bytes // row_bytes
    tile_hw = int(min(int(tile_hw), max(128, max_tile_bytes // row_bytes)))
    if tile_hw >= HW:
        tile_hw = HW                               # full extent block
    else:
        tile_hw = max(128, (tile_hw // 128) * 128)
        tile_hw = min(tile_hw, HW)
    num_k = pl.cdiv(HW, tile_hw)

    tile_bytes = Bt * C * tile_hw * itemsize
    w_bytes = 2 * C * Cr * jnp.dtype(w1.dtype).itemsize
    need = 2 * tile_bytes + 2 * w_bytes + 4 * Bt * C * 4 + (2 << 20)
    vmem_limit = int(min(max(32 * 1024 * 1024, need), int(0.9 * vmem_cap)))

    cost = pl.CostEstimate(
        flops=int(B * HW * C + 4 * B * C * Cr + 10 * B * C),
        transcendentals=int(B * C),
        bytes_accessed=int(B * HW * C * itemsize + w_bytes + B * C * itemsize),
    )

    kernel = functools.partial(_channel_attention_kernel,
                               hw_total=HW, tile_hw=tile_hw)

    out = pl.pallas_call(
        kernel,
        out_shape=jax.ShapeDtypeStruct((B, C), x.dtype),
        grid_spec=pltpu.PrefetchScalarGridSpec(
            num_scalar_prefetch=0,
            grid=(B // Bt, num_k),                 # k (reduction) innermost
            in_specs=[
                pl.BlockSpec((Bt, C, tile_hw), lambda b, k: (b, 0, k)),
                pl.BlockSpec((C, Cr), lambda b, k: (0, 0)),   # weights resident
                pl.BlockSpec((Cr, C), lambda b, k: (0, 0)),
            ],
            out_specs=pl.BlockSpec((Bt, C), lambda b, k: (b, 0)),
            scratch_shapes=[pltpu.VMEM((Bt, C), jnp.float32)],
        ),
        compiler_params=pltpu.CompilerParams(
            dimension_semantics=("parallel", "arbitrary"),
            vmem_limit_bytes=vmem_limit,
        ),
        cost_estimate=cost,
    )(x_flat, w1, w2)

    return out.reshape(B, C, 1, 1)


def channel_attention_ref(x, fc1_w, fc2_w):
    """Pure-JAX reference mirroring the PyTorch forward."""
    B, C, H, W = x.shape
    Cr = fc1_w.shape[0]
    m = jnp.max(x.reshape(B, C, H * W), axis=-1)          # (B, C)
    h = jnp.maximum(m @ fc1_w.reshape(Cr, C).T, 0.0)      # (B, Cr)
    y = h @ fc2_w.reshape(C, Cr).T                        # (B, C)
    return jax.nn.sigmoid(y).reshape(B, C, 1, 1)


if __name__ == "__main__":
    # Shapes consistent with the module: ratio=16 => channels must be >= 16.
    B, C, ratio = 2, 32, 16
    Cr = C // ratio  # 2

    key = jax.random.PRNGKey(0)
    kx, kx2, k1, k2 = jax.random.split(key, 4)
    fc1_w = 0.1 * jax.random.normal(k1, (Cr, C, 1, 1), dtype=jnp.float32)
    fc2_w = 0.1 * jax.random.normal(k2, (C, Cr, 1, 1), dtype=jnp.float32)

    # 1) Even multi-tile reduction path: HW=256 streamed as two 128-lane tiles.
    x = jax.random.normal(kx, (B, C, 16, 16), dtype=jnp.float32)
    ref = channel_attention_ref(x, fc1_w, fc2_w)
    out = jax.block_until_ready(channel_attention(x, fc1_w, fc2_w, tile_hw=128))
    assert out.shape == (B, C, 1, 1), out.shape
    assert jnp.allclose(out, ref, atol=1e-5, rtol=1e-5), "mismatch (even tiles)"

    # 2) Ragged last tile: HW=144 with tile_hw=128 exercises the masked path.
    x2 = jax.random.normal(kx2, (B, C, 12, 12), dtype=jnp.float32)
    ref2 = channel_attention_ref(x2, fc1_w, fc2_w)
    out2 = jax.block_until_ready(channel_attention(x2, fc1_w, fc2_w, tile_hw=128))
    assert jnp.allclose(out2, ref2, atol=1e-5, rtol=1e-5), "mismatch (ragged tile)"

    # 3) Auto tile sizing (collapses to a single full-extent block here).
    out3 = jax.block_until_ready(channel_attention(x, fc1_w, fc2_w))
    assert jnp.allclose(out3, ref, atol=1e-5, rtol=1e-5), "mismatch (auto tile)"

    print("KERNEL_OK")
</pallas_src>

<mosaic_0001>
module attributes {stable_mosaic.version = 11 : i64} {
  func.func @_channel_attention_kernel(%arg0: i32, %arg1: i32, %arg2: memref<2x32x128xf32, #tpu.memory_space<vmem>>, %arg3: memref<32x2xf32, #tpu.memory_space<vmem>>, %arg4: memref<2x32xf32, #tpu.memory_space<vmem>>, %arg5: memref<2x32xf32, #tpu.memory_space<vmem>>, %arg6: memref<2x32xf32, #tpu.memory_space<vmem>>) attributes {dimension_semantics = [#tpu.dimension_semantics<parallel>, #tpu.dimension_semantics<arbitrary>], iteration_bounds = array<i64: 1, 2>, scalar_prefetch = 0 : i64, scratch_operands = 1 : i64, tpu.core_type = #tpu.core_type<tc>, window_params = [{transform_indices = @transform_0, window_bounds = array<i64: 2, 32, 128>}, {pipeline_mode = #tpu.pipeline_mode<synchronous>, transform_indices = @transform_1, window_bounds = array<i64: 32, 2>}, {pipeline_mode = #tpu.pipeline_mode<synchronous>, transform_indices = @transform_2, window_bounds = array<i64: 2, 32>}, {transform_indices = @transform_3, window_bounds = array<i64: 2, 32>}]} {
    %c0_i32 = arith.constant 0 : i32
    %0 = arith.cmpi eq, %arg1, %c0_i32 : i32
    %1 = arith.extui %0 : i1 to i32
    %c0_i32_0 = arith.constant 0 : i32
    %2 = arith.cmpi ne, %1, %c0_i32_0 : i32
    scf.if %2 {
      %cst_8 = arith.constant 0xFF800000 : f32
      %11 = vector.broadcast %cst_8 : f32 to vector<2x32xf32>
      %c0_9 = arith.constant 0 : index
      %c0_10 = arith.constant 0 : index
      %12 = vector.load %arg6[%c0_9, %c0_10] : memref<2x32xf32, #tpu.memory_space<vmem>>, vector<2x32xf32>
      tpu.vector_store %arg6[%c0_9, %c0_10], %11 {strides = array<i32>} : memref<2x32xf32, #tpu.memory_space<vmem>>, vector<2x32xf32>,
    } else {
    }
    %c0 = arith.constant 0 : index
    %c0_1 = arith.constant 0 : index
    %c0_2 = arith.constant 0 : index
    %3 = vector.load %arg2[%c0, %c0_1, %c0_2] : memref<2x32x128xf32, #tpu.memory_space<vmem>>, vector<2x32x128xf32>
    %cst = arith.constant dense<0xFF800000> : vector<2x32xf32>
    %4 = vector.multi_reduction <maximumf>, %3, %cst [2] : vector<2x32x128xf32> to vector<2x32xf32>
    %c0_3 = arith.constant 0 : index
    %c0_4 = arith.constant 0 : index
    %5 = vector.load %arg6[%c0_3, %c0_4] : memref<2x32xf32, #tpu.memory_space<vmem>>, vector<2x32xf32>
    %6 = arith.maximumf %5, %4 : vector<2x32xf32>
    %c0_5 = arith.constant 0 : index
    %c0_6 = arith.constant 0 : index
    %7 = vector.load %arg6[%c0_5, %c0_6] : memref<2x32xf32, #tpu.memory_space<vmem>>, vector<2x32xf32>
    tpu.vector_store %arg6[%c0_5, %c0_6], %6 {strides = array<i32>} : memref<2x32xf32, #tpu.memory_space<vmem>>, vector<2x32xf32>,
    %c1_i32 = arith.constant 1 : i32
    %8 = arith.cmpi eq, %arg1, %c1_i32 : i32
    %9 = arith.extui %8 : i1 to i32
    %c0_i32_7 = arith.constant 0 : i32
    %10 = arith.cmpi ne, %9, %c0_i32_7 : i32
    scf.if %10 {
      %c0_8 = arith.constant 0 : index
      %c0_9 = arith.constant 0 : index
      %11 = vector.load %arg6[%c0_8, %c0_9] : memref<2x32xf32, #tpu.memory_space<vmem>>, vector<2x32xf32>
      %c0_10 = arith.constant 0 : index
      %c0_11 = arith.constant 0 : index
      %12 = vector.load %arg3[%c0_10, %c0_11] : memref<32x2xf32, #tpu.memory_space<vmem>>, vector<32x2xf32>
      %cst_12 = arith.constant dense<0.000000e+00> : vector<2x2xf32>
      %13 = tpu.matmul %11, %12, %cst_12 {dimension_numbers = #tpu.dot_dimension_numbers<[1], [0], [0], [1], [0, 0, 1, 1], [], []>} : vector<2x32xf32>, vector<32x2xf32>, vector<2x2xf32> -> vector<2x2xf32>
      %cst_13 = arith.constant 0.000000e+00 : f32
      %14 = vector.broadcast %cst_13 : f32 to vector<2x2xf32>
      %15 = arith.maximumf %13, %14 : vector<2x2xf32>
      %c0_14 = arith.constant 0 : index
      %c0_15 = arith.constant 0 : index
      %16 = vector.load %arg4[%c0_14, %c0_15] : memref<2x32xf32, #tpu.memory_space<vmem>>, vector<2x32xf32>
      %cst_16 = arith.constant dense<0.000000e+00> : vector<2x32xf32>
      %17 = tpu.matmul %15, %16, %cst_16 {dimension_numbers = #tpu.dot_dimension_numbers<[1], [0], [0], [1], [0, 0, 1, 1], [], []>} : vector<2x2xf32>, vector<2x32xf32>, vector<2x32xf32> -> vector<2x32xf32>
      %18 = arith.negf %17 : vector<2x32xf32>
      %19 = math.exp %18 : vector<2x32xf32>
      %cst_17 = arith.constant 1.000000e+00 : f32
      %20 = vector.broadcast %cst_17 : f32 to vector<2x32xf32>
      %21 = arith.addf %20, %19 : vector<2x32xf32>
      %22 = arith.divf %20, %21 : vector<2x32xf32>
      %c0_18 = arith.constant 0 : index
      %c0_19 = arith.constant 0 : index
      %23 = vector.load %arg5[%c0_18, %c0_19] : memref<2x32xf32, #tpu.memory_space<vmem>>, vector<2x32xf32>
      tpu.vector_store %arg5[%c0_18, %c0_19], %22 {strides = array<i32>} : memref<2x32xf32, #tpu.memory_space<vmem>>, vector<2x32xf32>,
    } else {
    }
    return
  }
  func.func @transform_0(%arg0: i32, %arg1: i32) -> (i32, i32, i32) {
    %c0_i32 = arith.constant 0 : i32
    %c0_i32_0 = arith.constant 0 : i32
    return %arg0, %c0_i32, %arg1 : i32, i32, i32
  }
  func.func @transform_1(%arg0: i32, %arg1: i32) -> (i32, i32) {
    %c0_i32 = arith.constant 0 : i32
    %c0_i32_0 = arith.constant 0 : i32
    %c0_i32_1 = arith.constant 0 : i32
    return %c0_i32, %c0_i32_0 : i32, i32
  }
  func.func @transform_2(%arg0: i32, %arg1: i32) -> (i32, i32) {
    %c0_i32 = arith.constant 0 : i32
    %c0_i32_0 = arith.constant 0 : i32
    %c0_i32_1 = arith.constant 0 : i32
    return %c0_i32, %c0_i32_0 : i32, i32
  }
  func.func @transform_3(%arg0: i32, %arg1: i32) -> (i32, i32) {
    %c0_i32 = arith.constant 0 : i32
    %c0_i32_0 = arith.constant 0 : i32
    return %arg0, %c0_i32 : i32, i32
  }
}

</mosaic_0001>

<llo_original>
// kernel: tpu_custom_call.1
$region0: #{tpu_custom_call.1}
  #allocation0 [shape = 'u32[]', space=smem, size = 0x4, offset = 0x4, fixed_abs, tag = 'smem constant byte address 0x4 - core index']
  #allocation1 [shape = 'u32[144,128]{1,0:T(1,128)}', space=vmem, size = 0x12000, scoped, tag = 'internal scratch']
  #allocation2 [shape = 'f32[2,32]{1,0:T(2,128)}', space=vmem, size = 0x400, scoped, tag = 'scratch operand']
  %s0 = inlined_call_operand.hbm [shape: f32[2,32,256], index: 0, kind: input, shape index: {}]
  %s1 = inlined_call_operand.vmem [shape: f32[32,2], index: 1, kind: input, shape index: {}]
  %s2 = inlined_call_operand.vmem [shape: f32[2,32], index: 2, kind: input, shape index: {}]
  %s3 = inlined_call_operand.hbm [shape: f32[2,32], index: 3, kind: output, shape index: {}]
  %s4 = sld [smem:[#allocation0]]
  $region57: #{tpu_custom_call.1} parent=0
    _
  %s6 = ssub.s32 1, %s4
  %s7 = scalar_select 0, %s6, %s4
  $region1: #{tpu_custom_call.1} parent=0
    #allocation3 [shape = 'u8[65536]{0}', space=vmem, size = 0x10000, scoped, tag = 'input window, operand 0']
    #allocation4 [shape = 's32[2]{0}', space=sflag, size = 0x8, scoped, tag = 'scoped memory for tpu_custom_call.1']
    #allocation5 [shape = 's32[2]{0}', space=sflag, size = 0x8, scoped, tag = 'scoped memory for tpu_custom_call.1']
    #allocation6 [shape = 'u8[1024]{0}', space=vmem, size = 0x400, scoped, tag = 'output window, operand 0, single buffered']
    %8 = vsyncpa [#allocation4], 0
    %s9 = scalar_lea.sflag [#allocation4], 1
    %10 = vsyncpa %s9, 0
    %11 = vsyncpa [#allocation5], 0
    loop: start=0, step=1, limit=4
    $region2: #{tpu_custom_call.1} parent=1 // loop_pre_header
      _
    $region3: #{tpu_custom_call.1} parent=1 // loop_header
      %s13 = sphi 0, %s17
      %p14 = scmp.ge.s32.totalorder %s13, 4
      %s20 = sphi 0, %s32
      %s21 = sphi 0, %s28
      %s22 = sphi 0, %s20
      %s23 = sphi 0, %s21
      %s24 = sphi 0, %s22
      %s25 = sphi 0, %s23
      %s37 = sphi 0, %s39
      %s40 = sphi 0, %s37
      %s41 = sphi 0, %s40
      %s57 = sphi 0, %s41
      %s61 = sphi 0, %s61
      %s63 = sphi 0, %s61
      %s64 = sphi 0, %s63
      %s78 = sphi 0, %s64
      %s82 = sphi 0, %s82
      %s84 = sphi 0, %s82
      %s85 = sphi 0, %s84
      %s99 = sphi 0, %s85
      %s105 = sphi 0, %s107
      %s108 = sphi 0, %s105
      %s109 = sphi 0, %s108
      %s125 = sphi 0, %s109
    $region4: #{tpu_custom_call.1} parent=1 // loop_header_branch
      %16 = sbr.rel (%p14) target = $region8
    $region5: #{tpu_custom_call.1} parent=1 // loop_body
      %s18 = ssub.s32 %s13, 1
      %s19 = ssub.s32 %s13, 2
      %s26 = sadd.s32 1, %s21
      %p27 = scmp.ge.s32.totalorder %s26, 2
      %s28 = scalar_select %p27, 0, %s26
      %s29 = sadd.s32 1, %s20
      %s30 = scalar_select %p27, %s29, %s20
      %p31 = scmp.ge.s32.totalorder %s30, 1
      %s32 = scalar_select %p31, 0, %s30
      %s33 = ssub.s32 %s20, %s32
      %s34 = ssub.s32 %s21, %s28
      %s35 = sor.u32 %s33, %s34
      %p36 = scmp.eq.s32.totalorder %s35, 0
      %s38 = sadd.s32 %s37, 1
      %s39 = scalar_select %p36, %s37, %s38
      %p42 = pneg %p36
      %p43 = scmp.eq.s32.totalorder %s13, 1
      %p44 = por %p42, %p43
      %p45 = scmp.ne.s32.totalorder %s37, %s40
      %p46 = scmp.eq.s32.totalorder %s13, 0
      %p47 = por %p45, %p46
      %p48 = scmp.ne.s32.totalorder %s37, %s40
      %p49 = scmp.eq.s32.totalorder %s18, 1
      %p50 = por %p48, %p49
      %p51 = scmp.ne.s32.totalorder %s40, %s41
      %p52 = scmp.eq.s32.totalorder %s18, 0
      %p53 = por %p51, %p52
      %p54 = scmp.ne.s32.totalorder %s40, %s41
      %p55 = scmp.eq.s32.totalorder %s19, 1
      %p56 = por %p54, %p55
      %p58 = scmp.ne.s32.totalorder %s41, %s57
      %p59 = scmp.eq.s32.totalorder %s19, 0
      %p60 = por %p58, %p59
      %s62 = sadd.s32 %s61, 1
      %p65 = scmp.eq.s32.totalorder %s13, 1
      %p66 = scmp.ne.s32.totalorder %s61, %s63
      %p67 = scmp.eq.s32.totalorder %s13, 0
      %p68 = por %p66, %p67
      %p69 = scmp.ne.s32.totalorder %s61, %s63
      %p70 = scmp.eq.s32.totalorder %s18, 1
      %p71 = por %p69, %p70
      %p72 = scmp.ne.s32.totalorder %s63, %s64
      %p73 = scmp.eq.s32.totalorder %s18, 0
      %p74 = por %p72, %p73
      %p75 = scmp.ne.s32.totalorder %s63, %s64
      %p76 = scmp.eq.s32.totalorder %s19, 1
      %p77 = por %p75, %p76
      %p79 = scmp.ne.s32.totalorder %s64, %s78
      %p80 = scmp.eq.s32.totalorder %s19, 0
      %p81 = por %p79, %p80
      %s83 = sadd.s32 %s82, 1
      %p86 = scmp.eq.s32.totalorder %s13, 1
      %p87 = scmp.ne.s32.totalorder %s82, %s84
      %p88 = scmp.eq.s32.totalorder %s13, 0
      %p89 = por %p87, %p88
      %p90 = scmp.ne.s32.totalorder %s82, %s84
      %p91 = scmp.eq.s32.totalorder %s18, 1
      %p92 = por %p90, %p91
      %p93 = scmp.ne.s32.totalorder %s84, %s85
      %p94 = scmp.eq.s32.totalorder %s18, 0
      %p95 = por %p93, %p94
      %p96 = scmp.ne.s32.totalorder %s84, %s85
      %p97 = scmp.eq.s32.totalorder %s19, 1
      %p98 = por %p96, %p97
      %p100 = scmp.ne.s32.totalorder %s85, %s99
      %p101 = scmp.eq.s32.totalorder %s19, 0
      %p102 = por %p100, %p101
      %s103 = ssub.s32 %s20, %s32
      %p104 = scmp.eq.s32.totalorder %s103, 0
      %s106 = sadd.s32 %s105, 1
      %s107 = scalar_select %p104, %s105, %s106
      %p110 = pneg %p104
      %p111 = scmp.eq.s32.totalorder %s13, 1
      %p112 = por %p110, %p111
      %p113 = scmp.ne.s32.totalorder %s105, %s108
      %p114 = scmp.eq.s32.totalorder %s13, 0
      %p115 = por %p113, %p114
      %p116 = scmp.ne.s32.totalorder %s105, %s108
      %p117 = scmp.eq.s32.totalorder %s18, 1
      %p118 = por %p116, %p117
      %p119 = scmp.ne.s32.totalorder %s108, %s109
      %p120 = scmp.eq.s32.totalorder %s18, 0
      %p121 = por %p119, %p120
      %p122 = scmp.ne.s32.totalorder %s108, %s109
      %p123 = scmp.eq.s32.totalorder %s19, 1
      %p124 = por %p122, %p123
      %p126 = scmp.ne.s32.totalorder %s109, %s125
      %p127 = scmp.eq.s32.totalorder %s19, 0
      %p128 = por %p126, %p127
      %p129 = scmp.le.s32.totalorder 1, %s13
      %p130 = scmp.lt.s32.totalorder %s13, 3
      %p131 = pnand %p129, %p130
      %p132 = pneg %p131
      // Predicated region
      $region9: #{tpu_custom_call.1} parent=5 // pred_check
        _
      $region10: #{tpu_custom_call.1} parent=5 // pred_check_branch
        %134 = sbr.rel (%p131) target = $region12
      $region11: #{tpu_custom_call.1} parent=5 // pred_region
        %s135 = ssub.s32 %s13, 1
        // Predicated region
        $region13: #{tpu_custom_call.1} parent=11 // pred_check
          %p136 = pneg %p74
        $region14: #{tpu_custom_call.1} parent=11 // pred_check_branch
          %138 = sbr.rel (%p136) target = $region16
        $region15: #{tpu_custom_call.1} parent=11 // pred_region
          _
        $region16: #{tpu_custom_call.1} parent=11 // pred_fallthru
          _
        // Predicated region
        $region17: #{tpu_custom_call.1} parent=11 // pred_check
          %p139 = pneg %p95
        $region18: #{tpu_custom_call.1} parent=11 // pred_check_branch
          %141 = sbr.rel (%p139) target = $region20
        $region19: #{tpu_custom_call.1} parent=11 // pred_region
          _
        $region20: #{tpu_custom_call.1} parent=11 // pred_fallthru
          _
      $region12: #{tpu_custom_call.1} parent=5 // pred_fallthru
        _
      %p142 = scmp.lt.s32.totalorder %s13, 2
      // Predicated region
      $region21: #{tpu_custom_call.1} parent=5 // pred_check
        %p143 = pneg %p142
      $region22: #{tpu_custom_call.1} parent=5 // pred_check_branch
        %145 = sbr.rel (%p143) target = $region24
      $region23: #{tpu_custom_call.1} parent=5 // pred_region
        // Predicated region
        $region25: #{tpu_custom_call.1} parent=23 // pred_check
          %p146 = pneg %p47
        $region26: #{tpu_custom_call.1} parent=23 // pred_check_branch
          %148 = sbr.rel (%p146) target = $region28
        $region27: #{tpu_custom_call.1} parent=23 // pred_region
          %s149 = sand.u32 %s37, 1
          %s150 = scalar_lea.sflag [#allocation4], %s149
          %s151 = sand.u32 %s37, 1
          %s152 = smul.addr %s151, 64
          %s153 = scalar_lea.vmem [#allocation3], %s152
          %s154 = smul.u32 2, %s20
          %s156 = ssub.s32 1024, 1024
          %157 = vsyncadd %s150, %s156
          %s158 = smul.addr %s154, 8
          %s159 = sadd.s32 %s21, %s158
          %s160 = smul.addr %s159, 128
          %s161 = scalar_lea.hbm %s0, %s160
          %s162 = sshll.u32 %s153, 4
          %s163 = int_to_ptr.vmem [resolvable:$true] %s162
          %168 = dma.hbm_to_vmem [thread:$0]  %s161, 1024, %s163, %s150, 256, 128, 8
        $region28: #{tpu_custom_call.1} parent=23 // pred_fallthru
          _
      $region24: #{tpu_custom_call.1} parent=5 // pred_fallthru
        _
      %p169 = scmp.le.s32.totalorder 1, %s13
      %p170 = scmp.lt.s32.totalorder %s13, 3
      %p171 = pnand %p169, %p170
      %p172 = pneg %p171
      // Predicated region
      $region29: #{tpu_custom_call.1} parent=5 // pred_check
        _
      $region30: #{tpu_custom_call.1} parent=5 // pred_check_branch
        %174 = sbr.rel (%p171) target = $region32
      $region31: #{tpu_custom_call.1} parent=5 // pred_region
        %s175 = ssub.s32 %s13, 1
        %s176 = sand.u32 %s40, 1
        %s177 = scalar_lea.sflag [#allocation4], %s176
        %s178 = sand.u32 %s40, 1
        %s179 = smul.addr %s178, 64
        %s180 = scalar_lea.vmem [#allocation3], %s179
        // Predicated region
        $region33: #{tpu_custom_call.1} parent=31 // pred_check
          %p181 = pneg %p53
        $region34: #{tpu_custom_call.1} parent=31 // pred_check_branch
          %183 = sbr.rel (%p181) target = $region36
        $region35: #{tpu_custom_call.1} parent=31 // pred_region
          %184 = dma.done %s177, 1024
        $region36: #{tpu_custom_call.1} parent=31 // pred_fallthru
          _
        %s185 = sand.u32 %s40, 1
        %s186 = scalar_lea.sflag [#allocation4], %s185
        %s187 = sand.u32 %s40, 1
        %s188 = smul.addr %s187, 64
        %s189 = scalar_lea.vmem [#allocation3], %s188
        %p190 = pneg %p53
        %p191 = pneg %p50
        %p192 = pneg %p74
        %p193 = pneg %p71
        %p194 = pneg %p95
        %p195 = pneg %p92
        %p196 = pneg %p121
        %p197 = pneg %p118
        %s198 = smul.u32 2, %s22
        %p199 = scmp.eq.s32.totalorder %s23, 0
        // Predicated region
        $region37: #{tpu_custom_call.1} parent=31 // pred_check
          %p200 = pneg %p199
        $region38: #{tpu_custom_call.1} parent=31 // pred_check_branch
          %202 = sbr.rel (%p200) target = $region40
        $region39: #{tpu_custom_call.1} parent=31 // pred_region
          %vm203 = vcmask 254976
          %204 = vst.msk [vmem:[#allocation2] sm:$0x3] %vm203, -inf
        $region40: #{tpu_custom_call.1} parent=31 // pred_fallthru
          _
        %v205 = vld [vmem:[%s180] sm:$0xff]
        %v206 = vld [vmem:[%s180 + $0x8] sm:$0xff]
        %v207 = vld [vmem:[%s180 + $0x10] sm:$0xff]
        %v208 = vld [vmem:[%s180 + $0x18] sm:$0xff]
        %v209 = vld [vmem:[%s180 + $0x20] sm:$0xff]
        %v210 = vld [vmem:[%s180 + $0x28] sm:$0xff]
        %v211 = vld [vmem:[%s180 + $0x30] sm:$0xff]
        %v212 = vld [vmem:[%s180 + $0x38] sm:$0xff]
        %213 = vmax.xlane.f32.xlu0 %v205
        %v214 = vpop.xlane.xlu0 %213
        %215 = vmax.xlane.f32.xlu0 %v206
        %v216 = vpop.xlane.xlu0 %215
        %217 = vmax.xlane.f32.xlu0 %v207
        %v218 = vpop.xlane.xlu0 %217
        %219 = vmax.xlane.f32.xlu0 %v208
        %v220 = vpop.xlane.xlu0 %219
        %221 = vmax.xlane.f32.xlu0 %v209
        %v222 = vpop.xlane.xlu0 %221
        %223 = vmax.xlane.f32.xlu0 %v210
        %v224 = vpop.xlane.xlu0 %223
        %225 = vmax.xlane.f32.xlu0 %v211
        %v226 = vpop.xlane.xlu0 %225
        %227 = vmax.xlane.f32.xlu0 %v212
        %v228 = vpop.xlane.xlu0 %227
        %v229 = vld [vmem:[#allocation2] sm:$0x3]
        %v238 = vlaneseq
        %v239 = vand.u32 %v238, 127
        %v240 = vlaneseq
        %v241 = vshrl.u32 %v240, 7
        %v242 = vsub.s32 %v239, %v241
        %v243 = vrot.slane %v214, %v242
        %v244 = vadd.s32 %v239, 4294967288
        %v245 = vlaneseq
        %v246 = vshrl.u32 %v245, 7
        %v247 = vsub.s32 %v244, %v246
        %v248 = vrot.slane %v216, %v247
        %vm249 = vcmask 130112
        %v250 = vsel %vm249, %v248, %v243
        %v251 = vadd.s32 %v239, 4294967280
        %v252 = vlaneseq
        %v253 = vshrl.u32 %v252, 7
        %v254 = vsub.s32 %v251, %v253
        %v255 = vrot.slane %v218, %v254
        %vm256 = vcmask 195712
        %v257 = vsel %vm256, %v255, %v250
        %v258 = vadd.s32 %v239, 4294967272
        %v259 = vlaneseq
        %v260 = vshrl.u32 %v259, 7
        %v261 = vsub.s32 %v258, %v260
        %v262 = vrot.slane %v220, %v261
        %vm263 = vcmask 261312
        %v264 = vsel %vm263, %v262, %v257
        %v265 = vlaneseq
        %v266 = vshrl.u32 %v265, 7
        %v267 = vsub.s32 %v239, %v266
        %v268 = vrot.slane %v222, %v267
        %v269 = vlaneseq
        %v270 = vshrl.u32 %v269, 7
        %v271 = vsub.s32 %v244, %v270
        %v272 = vrot.slane %v224, %v271
        %v273 = vsel %vm249, %v272, %v268
        %v274 = vlaneseq
        %v275 = vshrl.u32 %v274, 7
        %v276 = vsub.s32 %v251, %v275
        %v277 = vrot.slane %v226, %v276
        %v278 = vsel %vm256, %v277, %v273
        %v279 = vlaneseq
        %v280 = vshrl.u32 %v279, 7
        %v281 = vsub.s32 %v258, %v280
        %v282 = vrot.slane %v228, %v281
        %v283 = vsel %vm263, %v282, %v278
        %vm284 = vcmask 1041409
        %v285 = vsel %vm284, %v283, %v264
        %v287 = vmax.f32 %v229, %v285
        %vm288 = vcmask 254976
        %289 = vst.msk [vmem:[#allocation2] sm:$0x3] %vm288, %v287
        %p290 = scmp.eq.s32.totalorder %s23, 1
        // Predicated region
        $region41: #{tpu_custom_call.1} parent=31 // pred_check
          %p291 = pneg %p290
        $region42: #{tpu_custom_call.1} parent=31 // pred_check_branch
          %293 = sbr.rel (%p291) target = $region44
        $region43: #{tpu_custom_call.1} parent=31 // pred_region
          %v294 = vld [vmem:[#allocation2] sm:$0x3]
          %v295 = vld [vmem:[%s1] sm:$0xff]
          %v296 = vld [vmem:[%s1 + $0x8] sm:$0xff]
          %v297 = vld [vmem:[%s1 + $0x10] sm:$0xff]
          %v298 = vld [vmem:[%s1 + $0x18] sm:$0xff]
          %vm299 = vcmask 261120
          %v301 = vsel %vm299, %v294, 0
          %303 = vmatprep.subr.mxu0 0.0
          %304 = vmatpush1.msra.mxu0 %v295
          %305 = vmatprep.subr.mxu0 0.0
          %306 = vmatpush1.msra.mxu0 %v296
          %307 = vmatprep.subr.mxu0 0.0
          %308 = vmatpush1.msra.mxu0 %v297
          %309 = vmatprep.subr.mxu0 0.0
          %310 = vmatpush1.msra.mxu0 %v298
          %311 = vmatprep.subr.mxu0 0.0
          %312 = vmatpush1.msra.mxu0 0.0
          %313 = vmatprep.subr.mxu0 0.0
          %314 = vmatpush1.msra.mxu0 0.0
          %315 = vmatprep.subr.mxu0 0.0
          %316 = vmatpush1.msra.mxu0 0.0
          %317 = vmatprep.subr.mxu0 0.0
          %318 = vmatpush1.msra.mxu0 0.0
          %319 = vmatprep.subr.mxu0 0.0
          %320 = vmatpush1.msra.mxu0 0.0
          %321 = vmatprep.subr.mxu0 0.0
          %322 = vmatpush1.msra.mxu0 0.0
          %323 = vmatprep.subr.mxu0 0.0
          %324 = vmatpush1.msra.mxu0 0.0
          %325 = vmatprep.subr.mxu0 0.0
          %326 = vmatpush1.msra.mxu0 0.0
          %327 = vmatprep.subr.mxu0 0.0
          %328 = vmatpush1.msra.mxu0 0.0
          %329 = vmatprep.subr.mxu0 0.0
          %330 = vmatpush1.msra.mxu0 0.0
          %331 = vmatprep.subr.mxu0 0.0
          %332 = vmatpush1.msra.mxu0 0.0
          %333 = vmatprep.subr.mxu0 0.0
          %334 = vmatpush1.msra.mxu0 0.0
          %335 = vmatprep.subr.mxu0 0.0
          %336 = vmatpush1.msra.mxu0 0.0
          %337 = vmatprep.subr.mxu0 0.0
          %338 = vmatpush1.msra.mxu0 0.0
          %339 = vmatprep.subr.mxu0 0.0
          %340 = vmatpush1.msra.mxu0 0.0
          %341 = vmatprep.subr.mxu0 0.0
          %342 = vmatpush1.msra.mxu0 0.0
          %343 = vmatprep.subr.mxu0 0.0
          %344 = vmatpush1.msra.mxu0 0.0
          %345 = vmatprep.subr.mxu0 0.0
          %346 = vmatpush1.msra.mxu0 0.0
          %347 = vmatprep.subr.mxu0 0.0
          %348 = vmatpush1.msra.mxu0 0.0
          %349 = vmatprep.subr.mxu0 0.0
          %350 = vmatpush1.msra.mxu0 0.0
          %351 = vmatprep.subr.mxu0 0.0
          %352 = vmatpush1.msra.mxu0 0.0
          %353 = vmatprep.subr.mxu0 0.0
          %354 = vmatpush1.msra.mxu0 0.0
          %355 = vmatprep.subr.mxu0 0.0
          %356 = vmatpush1.msra.mxu0 0.0
          %357 = vmatprep.subr.mxu0 0.0
          %358 = vmatpush1.msra.mxu0 0.0
          %359 = vmatprep.subr.mxu0 0.0
          %360 = vmatpush1.msra.mxu0 0.0
          %361 = vmatprep.subr.mxu0 0.0
          %362 = vmatpush1.msra.mxu0 0.0
          %363 = vmatprep.subr.mxu0 0.0
          %364 = vmatpush1.msra.mxu0 0.0
          %365 = vmatprep.subr.mxu0 0.0
          %366 = vmatpush1.msra.mxu0 0.0
          %367 = vmatprep.mubr.f32.mxu0 0.0
          %368 = vmatmul.mubr.f32.gmra.mrb[0].mxu0 %v301
          %v369 = vpop.f32.mrb[0].mxu0
          %v370 = vadd.f32 0.0, %v369
          %v371 = vpop.f32.mrb[0].mxu0
          %372 = vdwg.mxu0
          %v373 = vmax.f32 %v370, 0.0
          %v374 = vld [vmem:[%s2] sm:$0x3]
          %vm375 = vcmask 15360
          %v377 = vsel %vm375, %v373, 0
          %vm379 = vcmask 1041408
          %v381 = vsel %vm379, %v374, 0
          %383 = vmatprep.subr.mxu0 0.0
          %384 = vmatpush1.msra.mxu0 %v381
          %385 = vmatprep.subr.mxu0 0.0
          %386 = vmatpush1.msra.mxu0 0.0
          %387 = vmatprep.subr.mxu0 0.0
          %388 = vmatpush1.msra.mxu0 0.0
          %389 = vmatprep.subr.mxu0 0.0
          %390 = vmatpush1.msra.mxu0 0.0
          %391 = vmatprep.subr.mxu0 0.0
          %392 = vmatpush1.msra.mxu0 0.0
          %393 = vmatprep.subr.mxu0 0.0
          %394 = vmatpush1.msra.mxu0 0.0
          %395 = vmatprep.subr.mxu0 0.0
          %396 = vmatpush1.msra.mxu0 0.0
          %397 = vmatprep.subr.mxu0 0.0
          %398 = vmatpush1.msra.mxu0 0.0
          %399 = vmatprep.subr.mxu0 0.0
          %400 = vmatpush1.msra.mxu0 0.0
          %401 = vmatprep.subr.mxu0 0.0
          %402 = vmatpush1.msra.mxu0 0.0
          %403 = vmatprep.subr.mxu0 0.0
          %404 = vmatpush1.msra.mxu0 0.0
          %405 = vmatprep.subr.mxu0 0.0
          %406 = vmatpush1.msra.mxu0 0.0
          %407 = vmatprep.subr.mxu0 0.0
          %408 = vmatpush1.msra.mxu0 0.0
          %409 = vmatprep.subr.mxu0 0.0
          %410 = vmatpush1.msra.mxu0 0.0
          %411 = vmatprep.subr.mxu0 0.0
          %412 = vmatpush1.msra.mxu0 0.0
          %413 = vmatprep.subr.mxu0 0.0
          %414 = vmatpush1.msra.mxu0 0.0
          %415 = vmatprep.subr.mxu0 0.0
          %416 = vmatpush1.msra.mxu0 0.0
          %417 = vmatprep.subr.mxu0 0.0
          %418 = vmatpush1.msra.mxu0 0.0
          %419 = vmatprep.subr.mxu0 0.0
          %420 = vmatpush1.msra.mxu0 0.0
          %421 = vmatprep.subr.mxu0 0.0
          %422 = vmatpush1.msra.mxu0 0.0
          %423 = vmatprep.subr.mxu0 0.0
          %424 = vmatpush1.msra.mxu0 0.0
          %425 = vmatprep.subr.mxu0 0.0
          %426 = vmatpush1.msra.mxu0 0.0
          %427 = vmatprep.subr.mxu0 0.0
          %428 = vmatpush1.msra.mxu0 0.0
          %429 = vmatprep.subr.mxu0 0.0
          %430 = vmatpush1.msra.mxu0 0.0
          %431 = vmatprep.subr.mxu0 0.0
          %432 = vmatpush1.msra.mxu0 0.0
          %433 = vmatprep.subr.mxu0 0.0
          %434 = vmatpush1.msra.mxu0 0.0
          %435 = vmatprep.subr.mxu0 0.0
          %436 = vmatpush1.msra.mxu0 0.0
          %437 = vmatprep.subr.mxu0 0.0
          %438 = vmatpush1.msra.mxu0 0.0
          %439 = vmatprep.subr.mxu0 0.0
          %440 = vmatpush1.msra.mxu0 0.0
          %441 = vmatprep.subr.mxu0 0.0
          %442 = vmatpush1.msra.mxu0 0.0
          %443 = vmatprep.subr.mxu0 0.0
          %444 = vmatpush1.msra.mxu0 0.0
          %445 = vmatprep.subr.mxu0 0.0
          %446 = vmatpush1.msra.mxu0 0.0
          %447 = vmatprep.mubr.f32.mxu0 0.0
          %448 = vmatmul.mubr.f32.gmra.mrb[0].mxu0 %v377
          %v449 = vpop.f32.mrb[0].mxu0
          %v450 = vadd.f32 0.0, %v449
          %v451 = vpop.f32.mrb[0].mxu0
          %452 = vdwg.mxu0
          %v453 = vxor.u32 %v450, 2147483648
          %v454 = vmul.f32 %v453, 1.442695
          %v455 = vpow.pop %v454
          %v456 = vadd.f32 %v455, 1.0
          %v457 = vrcp.pop %v456
          %v458 = vmul.f32 1.0, %v457
          %459 = vst.msk [vmem:[#allocation6] sm:$0x3] %vm288, %v458
        $region44: #{tpu_custom_call.1} parent=31 // pred_fallthru
          _
        // Predicated region
        $region45: #{tpu_custom_call.1} parent=31 // pred_check
          %p460 = pneg %p118
        $region46: #{tpu_custom_call.1} parent=31 // pred_check_branch
          %462 = sbr.rel (%p460) target = $region48
        $region47: #{tpu_custom_call.1} parent=31 // pred_region
          %s464 = ssub.s32 32, 32
          %465 = vsyncadd [#allocation5], %s464
          %s466 = smul.addr %s22, 32
          %s467 = scalar_lea.hbm %s3, %s466
          %s469 = sshll.u32 [#allocation6], 4
          %s470 = int_to_ptr.vmem [resolvable:$true] %s469
          %472 = dma.vmem_to_hbm [thread:$0]  %s470, 32, %s467, [#allocation5]
        $region48: #{tpu_custom_call.1} parent=31 // pred_fallthru
          _
        // Predicated region
        $region49: #{tpu_custom_call.1} parent=31 // pred_check
          %p473 = pneg %p118
        $region50: #{tpu_custom_call.1} parent=31 // pred_check_branch
          %475 = sbr.rel (%p473) target = $region52
        $region51: #{tpu_custom_call.1} parent=31 // pred_region
          %476 = dma.done [#allocation5], 32
        $region52: #{tpu_custom_call.1} parent=31 // pred_fallthru
          _
      $region32: #{tpu_custom_call.1} parent=5 // pred_fallthru
        _
      %p477 = scmp.le.s32.totalorder 2, %s13
      // Predicated region
      $region53: #{tpu_custom_call.1} parent=5 // pred_check
        %p478 = pneg %p477
      $region54: #{tpu_custom_call.1} parent=5 // pred_check_branch
        %480 = sbr.rel (%p478) target = $region56
      $region55: #{tpu_custom_call.1} parent=5 // pred_region
        %s481 = ssub.s32 %s13, 2
      $region56: #{tpu_custom_call.1} parent=5 // pred_fallthru
        _
    $region6: #{tpu_custom_call.1} parent=1 // loop_footer
      %s17 = sadd.s32 1, %s13
    $region7: #{tpu_custom_call.1} parent=1 // loop_footer_branch
      %12 = sbr.rel target = $region3
    $region8: #{tpu_custom_call.1} parent=1 // loop_exit
      _
    %482 = vsyncpa [#allocation4], 1
    %s483 = scalar_lea.sflag [#allocation4], 1
    %484 = vsyncpa %s483, 1
    %485 = vsyncpa [#allocation5], 1
    %s486 = scalar_lea.sflag [#allocation5], 1
    %487 = vsyncpa %s486, 1

</llo_original>
